<compile_context>
chip_gen: v7x
topology: tpu7x:2x2x1
jax: 0.10.0
libtpu: 0.0.40
codegen_flags: <defaults>
</compile_context>

<pallas_src>
import functools

import jax
import jax.numpy as jnp
from jax.experimental import pallas as pl
from jax.experimental.pallas import tpu as pltpu

BP = 8            # padded batch = f32 sublane count
OUT_LANES = 128   # lane-dense output width

# Packed weight-slab row layout (128 lanes wide, f32):
W_IN_ROW = 0      # rows [0:F)           lanes [0:H)   : W_ih0^T   (lanes [H:2H) stay 0)
B_WIDE_ROW = 8    # row  8               lanes [0:2H)  : [b_ih0+b_hh0 | b_ih1+b_hh1]
B_HEAD_ROW = 9    # row  9               lanes [0:2)   : b_lin
W_BLK_ROW = 16    # rows [16:16+2H)      lanes [0:2H)  : [[W_hh0^T, W_ih1^T], [0, W_hh1^T]]
                  # rows [16+2H:16+4H)   lanes [0:128) : head weight (rows [H:2H) cols 0:2 = W_lin^T)


def rnn_kernel(x_ref, h_ref, w_ref, out_ref, hs_ref, *, seq_len, n_hidden, n_features):
    H = n_hidden
    H2 = 2 * H
    F = n_features

    # ---- carve the packed weight slab (static slices) ------------------------------
    w_in = w_ref[W_IN_ROW:W_IN_ROW + F, 0:H2]                     # (F, 2H)
    b_wide = w_ref[B_WIDE_ROW:B_WIDE_ROW + 1, 0:H2]               # (1, 2H)
    b_head = w_ref[B_HEAD_ROW:B_HEAD_ROW + 1, :]                  # (1, 128)
    w_blk = w_ref[W_BLK_ROW:W_BLK_ROW + H2, 0:H2]                 # (2H, 2H)
    w_head = w_ref[W_BLK_ROW + H2:W_BLK_ROW + 2 * H2, :]          # (2H, 128)

    # ---- hoisted: per-step additive term for ALL steps in one matmul ----------------
    # block t, lanes [0:H)  = x_t @ W_ih0^T + (b_ih0 + b_hh0)
    # block t, lanes [H:2H) = (b_ih1 + b_hh1)
    xwb = jnp.dot(x_ref[...], w_in, preferred_element_type=jnp.float32) + b_wide

    lane = jax.lax.broadcasted_iota(jnp.int32, (BP, H2), dimension=1)
    first_half = lane < H

    # ---- skewed recurrence: carry s_t = [h0_t | h1_{t-1}] --------------------------
    s_init = h_ref[...]                                            # (BP, 2H) = [h0_-1 | h1_-1]
    t0 = jnp.tanh(jnp.dot(s_init, w_blk, preferred_element_type=jnp.float32)
                  + xwb[0:BP, :])
    s = jnp.where(first_half, t0, s_init)                          # [h0_0 | h1_-1]

    for t in range(1, seq_len):                                    # fully unrolled (static)
        s = jnp.tanh(jnp.dot(s, w_blk, preferred_element_type=jnp.float32)
                     + xwb[t * BP:(t + 1) * BP, :])                # [h0_t | h1_{t-1}]
        hs_ref[(t - 1) * BP:t * BP, :] = s                         # h1_{t-1} in lanes [H:2H)

    # epilogue step: lanes [H:2H) = h1_{T-1}; lanes [0:H) are unused garbage
    s_ep = jnp.tanh(jnp.dot(s, w_blk, preferred_element_type=jnp.float32)
                    + xwb[0:BP, :])
    hs_ref[(seq_len - 1) * BP:seq_len * BP, :] = s_ep

    # ---- head: one lane-dense matmul + one full-width store -------------------------
    out_ref[0:seq_len * BP, :] = (
        jnp.dot(hs_ref[...], w_head, preferred_element_type=jnp.float32) + b_head)

    # final hidden state packed into the same slab: lanes [0:H)=h0_{T-1}, [H:2H)=h1_{T-1}
    out_ref[seq_len * BP:(seq_len + 1) * BP, 0:H2] = jnp.where(first_half, s, s_ep)


@jax.jit
def rnn_forward(x, h_state, params):
    """x: (seq_len, B, F) f32, h_state: (2, B, H) f32."""
    (w_ih0, w_hh0, b_ih0, b_hh0,
     w_ih1, w_hh1, b_ih1, b_hh1,
     w_lin, b_lin) = params

    seq_len, B, F = x.shape
    n_layers, _, H = h_state.shape
    H2 = 2 * H
    assert n_layers == 2 and B <= BP and F <= 8 and H2 <= 128

    # ---- pack all parameters into ONE 128-lane f32 slab -----------------------------
    n_rows = W_BLK_ROW + 2 * H2
    slab = jnp.zeros((n_rows, OUT_LANES), jnp.float32)
    slab = slab.at[W_IN_ROW:W_IN_ROW + F, 0:H].set(w_ih0.T)
    slab = slab.at[B_WIDE_ROW, 0:H].set(b_ih0 + b_hh0)
    slab = slab.at[B_WIDE_ROW, H:H2].set(b_ih1 + b_hh1)
    slab = slab.at[B_HEAD_ROW, 0:2].set(b_lin)
    slab = slab.at[W_BLK_ROW:W_BLK_ROW + H, 0:H].set(w_hh0.T)
    slab = slab.at[W_BLK_ROW:W_BLK_ROW + H, H:H2].set(w_ih1.T)
    slab = slab.at[W_BLK_ROW + H:W_BLK_ROW + H2, H:H2].set(w_hh1.T)
    slab = slab.at[W_BLK_ROW + H2 + H:W_BLK_ROW + 2 * H2, 0:2].set(w_lin.T)

    # ---- batch-pad activations to the 8-row sublane group ---------------------------
    xp = jnp.zeros((seq_len, BP, F), jnp.float32).at[:, :B, :].set(x)
    xp = xp.reshape(seq_len * BP, F)
    hp = jnp.zeros((BP, H2), jnp.float32)
    hp = hp.at[:B, 0:H].set(h_state[0]).at[:B, H:H2].set(h_state[1])

    vmem = pl.BlockSpec(memory_space=pltpu.MemorySpace.VMEM)
    out_rows = (seq_len + 1) * BP

    kern = functools.partial(rnn_kernel, seq_len=seq_len, n_hidden=H, n_features=F)
    slab_out = pl.pallas_call(
        kern,
        out_shape=jax.ShapeDtypeStruct((out_rows, OUT_LANES), jnp.float32),
        in_specs=[vmem, vmem, vmem],
        out_specs=vmem,
        scratch_shapes=[pltpu.VMEM((seq_len * BP, H2), jnp.float32)],
    )(xp, hp, slab)

    # ---- host-side unpacking of the single output slab ------------------------------
    out = slab_out[0:seq_len * BP].reshape(seq_len, BP, OUT_LANES)[:, :B, 0:2]
    hrow = slab_out[seq_len * BP:seq_len * BP + B]
    h_new = jnp.stack([hrow[:, 0:H], hrow[:, H:H2]], axis=0)
    return out, h_new


def rnn_reference(x, h_state, params):
    """Pure-JAX reference mirroring the PyTorch module semantics."""
    (w_ih0, w_hh0, b_ih0, b_hh0,
     w_ih1, w_hh1, b_ih1, b_hh1,
     w_lin, b_lin) = params
    seq_len = x.shape[0]
    h0, h1 = h_state[0], h_state[1]
    outs = []
    for t in range(seq_len):
        h0 = jnp.tanh(x[t] @ w_ih0.T + b_ih0 + h0 @ w_hh0.T + b_hh0)
        h1 = jnp.tanh(h0 @ w_ih1.T + b_ih1 + h1 @ w_hh1.T + b_hh1)
        outs.append(h1 @ w_lin.T + b_lin)
    return jnp.stack(outs, axis=0), jnp.stack([h0, h1], axis=0)


def init_params(key, n_features, n_hidden):
    """Deterministic init matching the module's parameter shapes."""
    ks = jax.random.split(key, 10)
    bound = 1.0 / jnp.sqrt(n_hidden)

    def u(k, shape):
        return jax.random.uniform(k, shape, jnp.float32, -bound, bound)

    w_ih0 = u(ks[0], (n_hidden, n_features))
    w_hh0 = u(ks[1], (n_hidden, n_hidden))
    b_ih0 = u(ks[2], (n_hidden,))
    b_hh0 = u(ks[3], (n_hidden,))
    w_ih1 = u(ks[4], (n_hidden, n_hidden))
    w_hh1 = u(ks[5], (n_hidden, n_hidden))
    b_ih1 = u(ks[6], (n_hidden,))
    b_hh1 = u(ks[7], (n_hidden,))
    w_lin = u(ks[8], (2, n_hidden))
    b_lin = u(ks[9], (2,))
    return (w_ih0, w_hh0, b_ih0, b_hh0,
            w_ih1, w_hh1, b_ih1, b_hh1,
            w_lin, b_lin)


if __name__ == "__main__":
    n_features, n_hidden, seq_len, n_layers = 4, 32, 8, 2
    batch = 2

    key = jax.random.PRNGKey(0)
    k_param, k_x, k_h = jax.random.split(key, 3)

    params = init_params(k_param, n_features, n_hidden)
    x = jax.random.normal(k_x, (seq_len, batch, n_features), jnp.float32)
    h_state = jax.random.normal(k_h, (n_layers, batch, n_hidden), jnp.float32)

    out, h_new = rnn_forward(x, h_state, params)
    out = jax.block_until_ready(out)
    h_new = jax.block_until_ready(h_new)

    ref_out, ref_h = rnn_reference(x, h_state, params)
    assert out.shape == (seq_len, batch, 2)
    assert h_new.shape == (n_layers, batch, n_hidden)
    assert jnp.allclose(out, ref_out, rtol=1e-5, atol=1e-5)
    assert jnp.allclose(h_new, ref_h, rtol=1e-5, atol=1e-5)

    print("KERNEL_OK")
</pallas_src>

<mosaic_0001>
module attributes {stable_mosaic.version = 11 : i64} {
  func.func @rnn_kernel(%arg0: memref<64x4xf32, #tpu.memory_space<vmem>>, %arg1: memref<8x64xf32, #tpu.memory_space<vmem>>, %arg2: memref<144x128xf32, #tpu.memory_space<vmem>>, %arg3: memref<72x128xf32, #tpu.memory_space<vmem>>, %arg4: memref<64x64xf32, #tpu.memory_space<vmem>>) attributes {dimension_semantics = [], scalar_prefetch = 0 : i64, scratch_operands = 1 : i64, tpu.core_type = #tpu.core_type<tc>} {
    %c0 = arith.constant 0 : index
    %c0_0 = arith.constant 0 : index
    %0 = vector.load %arg2[%c0, %c0_0] : memref<144x128xf32, #tpu.memory_space<vmem>>, vector<4x64xf32>
    %c8 = arith.constant 8 : index
    %c0_1 = arith.constant 0 : index
    %1 = vector.load %arg2[%c8, %c0_1] : memref<144x128xf32, #tpu.memory_space<vmem>>, vector<1x64xf32>
    %c9 = arith.constant 9 : index
    %c0_2 = arith.constant 0 : index
    %2 = vector.load %arg2[%c9, %c0_2] : memref<144x128xf32, #tpu.memory_space<vmem>>, vector<1x128xf32>
    %c16 = arith.constant 16 : index
    %c0_3 = arith.constant 0 : index
    %3 = vector.load %arg2[%c16, %c0_3] : memref<144x128xf32, #tpu.memory_space<vmem>>, vector<64x64xf32>
    %c80 = arith.constant 80 : index
    %c0_4 = arith.constant 0 : index
    %4 = vector.load %arg2[%c80, %c0_4] : memref<144x128xf32, #tpu.memory_space<vmem>>, vector<64x128xf32>
    %c0_5 = arith.constant 0 : index
    %c0_6 = arith.constant 0 : index
    %5 = vector.load %arg0[%c0_5, %c0_6] : memref<64x4xf32, #tpu.memory_space<vmem>>, vector<64x4xf32>
    %cst = arith.constant dense<0.000000e+00> : vector<64x64xf32>
    %6 = tpu.matmul %5, %0, %cst {dimension_numbers = #tpu.dot_dimension_numbers<[1], [0], [0], [1], [0, 0, 1, 1], [], []>} : vector<64x4xf32>, vector<4x64xf32>, vector<64x64xf32> -> vector<64x64xf32>
    %7 = vector.broadcast %1 : vector<1x64xf32> to vector<64x64xf32>
    %8 = arith.addf %6, %7 : vector<64x64xf32>
    %9 = tpu.iota {dimensions = array<i32: 1>} : vector<8x64xi32>
    %c32_i32 = arith.constant 32 : i32
    %10 = vector.broadcast %c32_i32 : i32 to vector<8x64xi32>
    %11 = arith.cmpi slt, %9, %10 : vector<8x64xi32>
    %c0_7 = arith.constant 0 : index
    %c0_8 = arith.constant 0 : index
    %12 = vector.load %arg1[%c0_7, %c0_8] : memref<8x64xf32, #tpu.memory_space<vmem>>, vector<8x64xf32>
    %cst_9 = arith.constant dense<0.000000e+00> : vector<8x64xf32>
    %13 = tpu.matmul %12, %3, %cst_9 {dimension_numbers = #tpu.dot_dimension_numbers<[1], [0], [0], [1], [0, 0, 1, 1], [], []>} : vector<8x64xf32>, vector<64x64xf32>, vector<8x64xf32> -> vector<8x64xf32>
    %14 = vector.extract_strided_slice %8 {offsets = [0, 0], sizes = [8, 64], strides = [1, 1]} : vector<64x64xf32> to vector<8x64xf32>
    %15 = arith.addf %13, %14 : vector<8x64xf32>
    %16 = math.tanh %15 : vector<8x64xf32>
    %17 = arith.select %11, %16, %12 : vector<8x64xi1>, vector<8x64xf32>
    %cst_10 = arith.constant dense<0.000000e+00> : vector<8x64xf32>
    %18 = tpu.matmul %17, %3, %cst_10 {dimension_numbers = #tpu.dot_dimension_numbers<[1], [0], [0], [1], [0, 0, 1, 1], [], []>} : vector<8x64xf32>, vector<64x64xf32>, vector<8x64xf32> -> vector<8x64xf32>
    %19 = vector.extract_strided_slice %8 {offsets = [8, 0], sizes = [8, 64], strides = [1, 1]} : vector<64x64xf32> to vector<8x64xf32>
    %20 = arith.addf %18, %19 : vector<8x64xf32>
    %21 = math.tanh %20 : vector<8x64xf32>
    %c0_11 = arith.constant 0 : index
    %c0_12 = arith.constant 0 : index
    %22 = vector.load %arg4[%c0_11, %c0_12] : memref<64x64xf32, #tpu.memory_space<vmem>>, vector<8x64xf32>
    tpu.vector_store %arg4[%c0_11, %c0_12], %21 {strides = array<i32>} : memref<64x64xf32, #tpu.memory_space<vmem>>, vector<8x64xf32>,
    %cst_13 = arith.constant dense<0.000000e+00> : vector<8x64xf32>
    %23 = tpu.matmul %21, %3, %cst_13 {dimension_numbers = #tpu.dot_dimension_numbers<[1], [0], [0], [1], [0, 0, 1, 1], [], []>} : vector<8x64xf32>, vector<64x64xf32>, vector<8x64xf32> -> vector<8x64xf32>
    %24 = vector.extract_strided_slice %8 {offsets = [16, 0], sizes = [8, 64], strides = [1, 1]} : vector<64x64xf32> to vector<8x64xf32>
    %25 = arith.addf %23, %24 : vector<8x64xf32>
    %26 = math.tanh %25 : vector<8x64xf32>
    %c8_14 = arith.constant 8 : index
    %c0_15 = arith.constant 0 : index
    %27 = vector.load %arg4[%c8_14, %c0_15] : memref<64x64xf32, #tpu.memory_space<vmem>>, vector<8x64xf32>
    tpu.vector_store %arg4[%c8_14, %c0_15], %26 {strides = array<i32>} : memref<64x64xf32, #tpu.memory_space<vmem>>, vector<8x64xf32>,
    %cst_16 = arith.constant dense<0.000000e+00> : vector<8x64xf32>
    %28 = tpu.matmul %26, %3, %cst_16 {dimension_numbers = #tpu.dot_dimension_numbers<[1], [0], [0], [1], [0, 0, 1, 1], [], []>} : vector<8x64xf32>, vector<64x64xf32>, vector<8x64xf32> -> vector<8x64xf32>
    %29 = vector.extract_strided_slice %8 {offsets = [24, 0], sizes = [8, 64], strides = [1, 1]} : vector<64x64xf32> to vector<8x64xf32>
    %30 = arith.addf %28, %29 : vector<8x64xf32>
    %31 = math.tanh %30 : vector<8x64xf32>
    %c16_17 = arith.constant 16 : index
    %c0_18 = arith.constant 0 : index
    %32 = vector.load %arg4[%c16_17, %c0_18] : memref<64x64xf32, #tpu.memory_space<vmem>>, vector<8x64xf32>
    tpu.vector_store %arg4[%c16_17, %c0_18], %31 {strides = array<i32>} : memref<64x64xf32, #tpu.memory_space<vmem>>, vector<8x64xf32>,
    %cst_19 = arith.constant dense<0.000000e+00> : vector<8x64xf32>
    %33 = tpu.matmul %31, %3, %cst_19 {dimension_numbers = #tpu.dot_dimension_numbers<[1], [0], [0], [1], [0, 0, 1, 1], [], []>} : vector<8x64xf32>, vector<64x64xf32>, vector<8x64xf32> -> vector<8x64xf32>
    %34 = vector.extract_strided_slice %8 {offsets = [32, 0], sizes = [8, 64], strides = [1, 1]} : vector<64x64xf32> to vector<8x64xf32>
    %35 = arith.addf %33, %34 : vector<8x64xf32>
    %36 = math.tanh %35 : vector<8x64xf32>
    %c24 = arith.constant 24 : index
    %c0_20 = arith.constant 0 : index
    %37 = vector.load %arg4[%c24, %c0_20] : memref<64x64xf32, #tpu.memory_space<vmem>>, vector<8x64xf32>
    tpu.vector_store %arg4[%c24, %c0_20], %36 {strides = array<i32>} : memref<64x64xf32, #tpu.memory_space<vmem>>, vector<8x64xf32>,
    %cst_21 = arith.constant dense<0.000000e+00> : vector<8x64xf32>
    %38 = tpu.matmul %36, %3, %cst_21 {dimension_numbers = #tpu.dot_dimension_numbers<[1], [0], [0], [1], [0, 0, 1, 1], [], []>} : vector<8x64xf32>, vector<64x64xf32>, vector<8x64xf32> -> vector<8x64xf32>
    %39 = vector.extract_strided_slice %8 {offsets = [40, 0], sizes = [8, 64], strides = [1, 1]} : vector<64x64xf32> to vector<8x64xf32>
    %40 = arith.addf %38, %39 : vector<8x64xf32>
    %41 = math.tanh %40 : vector<8x64xf32>
    %c32 = arith.constant 32 : index
    %c0_22 = arith.constant 0 : index
    %42 = vector.load %arg4[%c32, %c0_22] : memref<64x64xf32, #tpu.memory_space<vmem>>, vector<8x64xf32>
    tpu.vector_store %arg4[%c32, %c0_22], %41 {strides = array<i32>} : memref<64x64xf32, #tpu.memory_space<vmem>>, vector<8x64xf32>,
    %cst_23 = arith.constant dense<0.000000e+00> : vector<8x64xf32>
    %43 = tpu.matmul %41, %3, %cst_23 {dimension_numbers = #tpu.dot_dimension_numbers<[1], [0], [0], [1], [0, 0, 1, 1], [], []>} : vector<8x64xf32>, vector<64x64xf32>, vector<8x64xf32> -> vector<8x64xf32>
    %44 = vector.extract_strided_slice %8 {offsets = [48, 0], sizes = [8, 64], strides = [1, 1]} : vector<64x64xf32> to vector<8x64xf32>
    %45 = arith.addf %43, %44 : vector<8x64xf32>
    %46 = math.tanh %45 : vector<8x64xf32>
    %c40 = arith.constant 40 : index
    %c0_24 = arith.constant 0 : index
    %47 = vector.load %arg4[%c40, %c0_24] : memref<64x64xf32, #tpu.memory_space<vmem>>, vector<8x64xf32>
    tpu.vector_store %arg4[%c40, %c0_24], %46 {strides = array<i32>} : memref<64x64xf32, #tpu.memory_space<vmem>>, vector<8x64xf32>,
    %cst_25 = arith.constant dense<0.000000e+00> : vector<8x64xf32>
    %48 = tpu.matmul %46, %3, %cst_25 {dimension_numbers = #tpu.dot_dimension_numbers<[1], [0], [0], [1], [0, 0, 1, 1], [], []>} : vector<8x64xf32>, vector<64x64xf32>, vector<8x64xf32> -> vector<8x64xf32>
    %49 = vector.extract_strided_slice %8 {offsets = [56, 0], sizes = [8, 64], strides = [1, 1]} : vector<64x64xf32> to vector<8x64xf32>
    %50 = arith.addf %48, %49 : vector<8x64xf32>
    %51 = math.tanh %50 : vector<8x64xf32>
    %c48 = arith.constant 48 : index
    %c0_26 = arith.constant 0 : index
    %52 = vector.load %arg4[%c48, %c0_26] : memref<64x64xf32, #tpu.memory_space<vmem>>, vector<8x64xf32>
    tpu.vector_store %arg4[%c48, %c0_26], %51 {strides = array<i32>} : memref<64x64xf32, #tpu.memory_space<vmem>>, vector<8x64xf32>,
    %cst_27 = arith.constant dense<0.000000e+00> : vector<8x64xf32>
    %53 = tpu.matmul %51, %3, %cst_27 {dimension_numbers = #tpu.dot_dimension_numbers<[1], [0], [0], [1], [0, 0, 1, 1], [], []>} : vector<8x64xf32>, vector<64x64xf32>, vector<8x64xf32> -> vector<8x64xf32>
    %54 = vector.extract_strided_slice %8 {offsets = [0, 0], sizes = [8, 64], strides = [1, 1]} : vector<64x64xf32> to vector<8x64xf32>
    %55 = arith.addf %53, %54 : vector<8x64xf32>
    %56 = math.tanh %55 : vector<8x64xf32>
    %c56 = arith.constant 56 : index
    %c0_28 = arith.constant 0 : index
    %57 = vector.load %arg4[%c56, %c0_28] : memref<64x64xf32, #tpu.memory_space<vmem>>, vector<8x64xf32>
    tpu.vector_store %arg4[%c56, %c0_28], %56 {strides = array<i32>} : memref<64x64xf32, #tpu.memory_space<vmem>>, vector<8x64xf32>,
    %c0_29 = arith.constant 0 : index
    %c0_30 = arith.constant 0 : index
    %58 = vector.load %arg4[%c0_29, %c0_30] : memref<64x64xf32, #tpu.memory_space<vmem>>, vector<64x64xf32>
    %cst_31 = arith.constant dense<0.000000e+00> : vector<64x128xf32>
    %59 = tpu.matmul %58, %4, %cst_31 {dimension_numbers = #tpu.dot_dimension_numbers<[1], [0], [0], [1], [0, 0, 1, 1], [], []>} : vector<64x64xf32>, vector<64x128xf32>, vector<64x128xf32> -> vector<64x128xf32>
    %60 = vector.broadcast %2 : vector<1x128xf32> to vector<64x128xf32>
    %61 = arith.addf %59, %60 : vector<64x128xf32>
    %c0_32 = arith.constant 0 : index
    %c0_33 = arith.constant 0 : index
    %62 = vector.load %arg3[%c0_32, %c0_33] : memref<72x128xf32, #tpu.memory_space<vmem>>, vector<64x128xf32>
    tpu.vector_store %arg3[%c0_32, %c0_33], %61 {strides = array<i32>} : memref<72x128xf32, #tpu.memory_space<vmem>>, vector<64x128xf32>,
    %63 = arith.select %11, %51, %56 : vector<8x64xi1>, vector<8x64xf32>
    %c64 = arith.constant 64 : index
    %c0_34 = arith.constant 0 : index
    %64 = vector.load %arg3[%c64, %c0_34] : memref<72x128xf32, #tpu.memory_space<vmem>>, vector<8x64xf32>
    tpu.vector_store %arg3[%c64, %c0_34], %63 {strides = array<i32>} : memref<72x128xf32, #tpu.memory_space<vmem>>, vector<8x64xf32>,
    return
  }
}

</mosaic_0001>

<llo_original>
// kernel: rnn_forward.1
$region0: #{rnn_forward.1}
  #allocation0 [shape = 'u32[]', space=smem, size = 0x4, offset = 0x4, fixed_abs, tag = 'smem constant byte address 0x4 - core index']
  #allocation1 [shape = 'u32[144,128]{1,0:T(1,128)}', space=vmem, size = 0x12000, scoped, tag = 'internal scratch']
  #allocation2 [shape = 'f32[64,64]{1,0:T(8,128)}', space=vmem, size = 0x8000, scoped, tag = 'scratch operand']
  %s0 = inlined_call_operand.vmem [shape: f32[64,4], index: 0, kind: input, shape index: {}]
  %s1 = inlined_call_operand.vmem [shape: f32[8,64], index: 1, kind: input, shape index: {}]
  %s2 = inlined_call_operand.vmem [shape: f32[144,128], index: 2, kind: input, shape index: {}]
  %s3 = inlined_call_operand.vmem [shape: f32[72,128], index: 3, kind: output, shape index: {}]
  %s4 = sld [smem:[#allocation0]]
  $region22: #{rnn_forward.1} parent=0
    _
  %s6 = ssub.s32 1, %s4
  %s7 = scalar_select 0, %s6, %s4
  // Predicated region
  $region2: #{rnn_forward.1} parent=0 // pred_check
    _
  $region3: #{rnn_forward.1} parent=0 // pred_check_branch
    %9 = sbr.rel (0) target = $region5
  $region4: #{rnn_forward.1} parent=0 // pred_region
    _
  $region5: #{rnn_forward.1} parent=0 // pred_fallthru
    _
  // Predicated region
  $region6: #{rnn_forward.1} parent=0 // pred_check
    _
  $region7: #{rnn_forward.1} parent=0 // pred_check_branch
    %11 = sbr.rel (0) target = $region9
  $region8: #{rnn_forward.1} parent=0 // pred_region
    _
  $region9: #{rnn_forward.1} parent=0 // pred_fallthru
    _
  // Predicated region
  $region10: #{rnn_forward.1} parent=0 // pred_check
    _
  $region11: #{rnn_forward.1} parent=0 // pred_check_branch
    %13 = sbr.rel (0) target = $region13
  $region12: #{rnn_forward.1} parent=0 // pred_region
    _
  $region13: #{rnn_forward.1} parent=0 // pred_fallthru
    _
  %v14 = vld [vmem:[%s2] sm:$0xf]
  %v15 = vld [vmem:[%s2 + $0x8] sm:$0x1]
  %v16 = vld [vmem:[%s2 + $0x9] sm:$0x1]
  %v17 = vld [vmem:[%s2 + $0x10] sm:$0xff]
  %v18 = vld [vmem:[%s2 + $0x18] sm:$0xff]
  %v19 = vld [vmem:[%s2 + $0x20] sm:$0xff]
  %v20 = vld [vmem:[%s2 + $0x28] sm:$0xff]
  %v21 = vld [vmem:[%s2 + $0x30] sm:$0xff]
  %v22 = vld [vmem:[%s2 + $0x38] sm:$0xff]
  %v23 = vld [vmem:[%s2 + $0x40] sm:$0xff]
  %v24 = vld [vmem:[%s2 + $0x48] sm:$0xff]
  %v25 = vld [vmem:[%s2 + $0x50] sm:$0xff]
  %v26 = vld [vmem:[%s2 + $0x58] sm:$0xff]
  %v27 = vld [vmem:[%s2 + $0x60] sm:$0xff]
  %v28 = vld [vmem:[%s2 + $0x68] sm:$0xff]
  %v29 = vld [vmem:[%s2 + $0x70] sm:$0xff]
  %v30 = vld [vmem:[%s2 + $0x78] sm:$0xff]
  %v31 = vld [vmem:[%s2 + $0x80] sm:$0xff]
  %v32 = vld [vmem:[%s2 + $0x88] sm:$0xff]
  %v33 = vld [vmem:[%s0] sm:$0xff]
  %v34 = vld [vmem:[%s0 + $0x8] sm:$0xff]
  %v35 = vld [vmem:[%s0 + $0x10] sm:$0xff]
  %v36 = vld [vmem:[%s0 + $0x18] sm:$0xff]
  %v37 = vld [vmem:[%s0 + $0x20] sm:$0xff]
  %v38 = vld [vmem:[%s0 + $0x28] sm:$0xff]
  %v39 = vld [vmem:[%s0 + $0x30] sm:$0xff]
  %v40 = vld [vmem:[%s0 + $0x38] sm:$0xff]
  %v41 = vlaneseq
  %v42 = vshrl.u32 %v41, 7
  %v43 = vsub.s32 0, %v42
  %v44 = vrot.slane %v15, %v43
  %vm45 = vcmask 31744
  %v47 = vsel %vm45, %v33, 0
  %v50 = vsel %vm45, %v34, 0
  %v53 = vsel %vm45, %v35, 0
  %v56 = vsel %vm45, %v36, 0
  %v59 = vsel %vm45, %v37, 0
  %v62 = vsel %vm45, %v38, 0
  %v65 = vsel %vm45, %v39, 0
  %v68 = vsel %vm45, %v40, 0
  %vm70 = vcmask 1043456
  %v72 = vsel %vm70, %v14, 0
  %74 = vmatprep.subr.mxu0 0.0
  %75 = vmatpush1.msra.mxu0 %v72
  %76 = vmatprep.subr.mxu0 0.0
  %77 = vmatpush1.msra.mxu0 0.0
  %78 = vmatprep.subr.mxu0 0.0
  %79 = vmatpush1.msra.mxu0 0.0
  %80 = vmatprep.subr.mxu0 0.0
  %81 = vmatpush1.msra.mxu0 0.0
  %82 = vmatprep.subr.mxu0 0.0
  %83 = vmatpush1.msra.mxu0 0.0
  %84 = vmatprep.subr.mxu0 0.0
  %85 = vmatpush1.msra.mxu0 0.0
  %86 = vmatprep.subr.mxu0 0.0
  %87 = vmatpush1.msra.mxu0 0.0
  %88 = vmatprep.subr.mxu0 0.0
  %89 = vmatpush1.msra.mxu0 0.0
  %90 = vmatprep.subr.mxu0 0.0
  %91 = vmatpush1.msra.mxu0 0.0
  %92 = vmatprep.subr.mxu0 0.0
  %93 = vmatpush1.msra.mxu0 0.0
  %94 = vmatprep.subr.mxu0 0.0
  %95 = vmatpush1.msra.mxu0 0.0
  %96 = vmatprep.subr.mxu0 0.0
  %97 = vmatpush1.msra.mxu0 0.0
  %98 = vmatprep.subr.mxu0 0.0
  %99 = vmatpush1.msra.mxu0 0.0
  %100 = vmatprep.subr.mxu0 0.0
  %101 = vmatpush1.msra.mxu0 0.0
  %102 = vmatprep.subr.mxu0 0.0
  %103 = vmatpush1.msra.mxu0 0.0
  %104 = vmatprep.subr.mxu0 0.0
  %105 = vmatpush1.msra.mxu0 0.0
  %106 = vmatprep.subr.mxu0 0.0
  %107 = vmatpush1.msra.mxu0 0.0
  %108 = vmatprep.subr.mxu0 0.0
  %109 = vmatpush1.msra.mxu0 0.0
  %110 = vmatprep.subr.mxu0 0.0
  %111 = vmatpush1.msra.mxu0 0.0
  %112 = vmatprep.subr.mxu0 0.0
  %113 = vmatpush1.msra.mxu0 0.0
  %114 = vmatprep.subr.mxu0 0.0
  %115 = vmatpush1.msra.mxu0 0.0
  %116 = vmatprep.subr.mxu0 0.0
  %117 = vmatpush1.msra.mxu0 0.0
  %118 = vmatprep.subr.mxu0 0.0
  %119 = vmatpush1.msra.mxu0 0.0
  %120 = vmatprep.subr.mxu0 0.0
  %121 = vmatpush1.msra.mxu0 0.0
  %122 = vmatprep.subr.mxu0 0.0
  %123 = vmatpush1.msra.mxu0 0.0
  %124 = vmatprep.subr.mxu0 0.0
  %125 = vmatpush1.msra.mxu0 0.0
  %126 = vmatprep.subr.mxu0 0.0
  %127 = vmatpush1.msra.mxu0 0.0
  %128 = vmatprep.subr.mxu0 0.0
  %129 = vmatpush1.msra.mxu0 0.0
  %130 = vmatprep.subr.mxu0 0.0
  %131 = vmatpush1.msra.mxu0 0.0
  %132 = vmatprep.subr.mxu0 0.0
  %133 = vmatpush1.msra.mxu0 0.0
  %134 = vmatprep.subr.mxu0 0.0
  %135 = vmatpush1.msra.mxu0 0.0
  %136 = vmatprep.subr.mxu0 0.0
  %137 = vmatpush1.msra.mxu0 0.0
  %138 = vmatprep.mubr.f32.mxu0 0.0
  %139 = vmatmul.mubr.f32.gmra.mrb[0].mxu0 %v47
  %v140 = vpop.f32.mrb[0].mxu0
  %v141 = vadd.f32 %v44, %v140
  %v142 = vpop.f32.mrb[0].mxu0
  %143 = vmatprep.mubr.f32.mxu0 0.0
  %144 = vmatmul.mubr.f32.gmra.mrb[0].mxu0 %v50
  %v145 = vpop.f32.mrb[0].mxu0
  %v146 = vadd.f32 %v44, %v145
  %v147 = vpop.f32.mrb[0].mxu0
  %148 = vmatprep.mubr.f32.mxu0 0.0
  %149 = vmatmul.mubr.f32.gmra.mrb[0].mxu0 %v53
  %v150 = vpop.f32.mrb[0].mxu0
  %v151 = vadd.f32 %v44, %v150
  %v152 = vpop.f32.mrb[0].mxu0
  %153 = vmatprep.mubr.f32.mxu0 0.0
  %154 = vmatmul.mubr.f32.gmra.mrb[0].mxu0 %v56
  %v155 = vpop.f32.mrb[0].mxu0
  %v156 = vadd.f32 %v44, %v155
  %v157 = vpop.f32.mrb[0].mxu0
  %158 = vmatprep.mubr.f32.mxu0 0.0
  %159 = vmatmul.mubr.f32.gmra.mrb[0].mxu0 %v59
  %v160 = vpop.f32.mrb[0].mxu0
  %v161 = vadd.f32 %v44, %v160
  %v162 = vpop.f32.mrb[0].mxu0
  %163 = vmatprep.mubr.f32.mxu0 0.0
  %164 = vmatmul.mubr.f32.gmra.mrb[0].mxu0 %v62
  %v165 = vpop.f32.mrb[0].mxu0
  %v166 = vadd.f32 %v44, %v165
  %v167 = vpop.f32.mrb[0].mxu0
  %168 = vmatprep.mubr.f32.mxu0 0.0
  %169 = vmatmul.mubr.f32.gmra.mrb[0].mxu0 %v65
  %v170 = vpop.f32.mrb[0].mxu0
  %v171 = vadd.f32 %v44, %v170
  %v172 = vpop.f32.mrb[0].mxu0
  %173 = vmatprep.mubr.f32.mxu0 0.0
  %174 = vmatmul.mubr.f32.gmra.mrb[0].mxu0 %v68
  %v175 = vpop.f32.mrb[0].mxu0
  %v176 = vadd.f32 %v44, %v175
  %v177 = vpop.f32.mrb[0].mxu0
  %178 = vdwg.mxu0
  %v179 = vlaneseq
  %v180 = vand.u32 %v179, 127
  %vm181 = vcmp.lt.s32.totalorder %v180, 32
  %v182 = vld [vmem:[%s1] sm:$0xff]
  %vm183 = vcmask 523264
  %v185 = vsel %vm183, %v182, 0
  %187 = vmatprep.subr.mxu0 0.0
  %188 = vmatpush1.msra.mxu0 %v17
  %189 = vmatprep.subr.mxu0 0.0
  %190 = vmatpush1.msra.mxu0 %v18
  %191 = vmatprep.subr.mxu0 0.0
  %192 = vmatpush1.msra.mxu0 %v19
  %193 = vmatprep.subr.mxu0 0.0
  %194 = vmatpush1.msra.mxu0 %v20
  %195 = vmatprep.subr.mxu0 0.0
  %196 = vmatpush1.msra.mxu0 %v21
  %197 = vmatprep.subr.mxu0 0.0
  %198 = vmatpush1.msra.mxu0 %v22
  %199 = vmatprep.subr.mxu0 0.0
  %200 = vmatpush1.msra.mxu0 %v23
  %201 = vmatprep.subr.mxu0 0.0
  %202 = vmatpush1.msra.mxu0 %v24
  %203 = vmatprep.subr.mxu0 0.0
  %204 = vmatpush1.msra.mxu0 0.0
  %205 = vmatprep.subr.mxu0 0.0
  %206 = vmatpush1.msra.mxu0 0.0
  %207 = vmatprep.subr.mxu0 0.0
  %208 = vmatpush1.msra.mxu0 0.0
  %209 = vmatprep.subr.mxu0 0.0
  %210 = vmatpush1.msra.mxu0 0.0
  %211 = vmatprep.subr.mxu0 0.0
  %212 = vmatpush1.msra.mxu0 0.0
  %213 = vmatprep.subr.mxu0 0.0
  %214 = vmatpush1.msra.mxu0 0.0
  %215 = vmatprep.subr.mxu0 0.0
  %216 = vmatpush1.msra.mxu0 0.0
  %217 = vmatprep.subr.mxu0 0.0
  %218 = vmatpush1.msra.mxu0 0.0
  %219 = vmatprep.subr.mxu0 0.0
  %220 = vmatpush1.msra.mxu0 0.0
  %221 = vmatprep.subr.mxu0 0.0
  %222 = vmatpush1.msra.mxu0 0.0
  %223 = vmatprep.subr.mxu0 0.0
  %224 = vmatpush1.msra.mxu0 0.0
  %225 = vmatprep.subr.mxu0 0.0
  %226 = vmatpush1.msra.mxu0 0.0
  %227 = vmatprep.subr.mxu0 0.0
  %228 = vmatpush1.msra.mxu0 0.0
  %229 = vmatprep.subr.mxu0 0.0
  %230 = vmatpush1.msra.mxu0 0.0
  %231 = vmatprep.subr.mxu0 0.0
  %232 = vmatpush1.msra.mxu0 0.0
  %233 = vmatprep.subr.mxu0 0.0
  %234 = vmatpush1.msra.mxu0 0.0
  %235 = vmatprep.subr.mxu0 0.0
  %236 = vmatpush1.msra.mxu0 0.0
  %237 = vmatprep.subr.mxu0 0.0
  %238 = vmatpush1.msra.mxu0 0.0
  %239 = vmatprep.subr.mxu0 0.0
  %240 = vmatpush1.msra.mxu0 0.0
  %241 = vmatprep.subr.mxu0 0.0
  %242 = vmatpush1.msra.mxu0 0.0
  %243 = vmatprep.subr.mxu0 0.0
  %244 = vmatpush1.msra.mxu0 0.0
  %245 = vmatprep.subr.mxu0 0.0
  %246 = vmatpush1.msra.mxu0 0.0
  %247 = vmatprep.subr.mxu0 0.0
  %248 = vmatpush1.msra.mxu0 0.0
  %249 = vmatprep.subr.mxu0 0.0
  %250 = vmatpush1.msra.mxu0 0.0
  %251 = vmatprep.mubr.f32.mxu0 0.0
  %252 = vmatmul.mubr.f32.gmra.mrb[0].mxu0 %v185
  %v253 = vpop.f32.mrb[0].mxu0
  %v254 = vadd.f32 %v141, %v253
  %v255 = vpop.f32.mrb[0].mxu0
  %256 = vdwg.mxu0
  %v257 = vtanh.pop %v254
  %v258 = vsel %vm181, %v257, %v182
  %v260 = vsel %vm183, %v258, 0
  %262 = vmatprep.subr.mxu0 0.0
  %263 = vmatpush1.msra.mxu0 %v17
  %264 = vmatprep.subr.mxu0 0.0
  %265 = vmatpush1.msra.mxu0 %v18
  %266 = vmatprep.subr.mxu0 0.0
  %267 = vmatpush1.msra.mxu0 %v19
  %268 = vmatprep.subr.mxu0 0.0
  %269 = vmatpush1.msra.mxu0 %v20
  %270 = vmatprep.subr.mxu0 0.0
  %271 = vmatpush1.msra.mxu0 %v21
  %272 = vmatprep.subr.mxu0 0.0
  %273 = vmatpush1.msra.mxu0 %v22
  %274 = vmatprep.subr.mxu0 0.0
  %275 = vmatpush1.msra.mxu0 %v23
  %276 = vmatprep.subr.mxu0 0.0
  %277 = vmatpush1.msra.mxu0 %v24
  %278 = vmatprep.subr.mxu0 0.0
  %279 = vmatpush1.msra.mxu0 0.0
  %280 = vmatprep.subr.mxu0 0.0
  %281 = vmatpush1.msra.mxu0 0.0
  %282 = vmatprep.subr.mxu0 0.0
  %283 = vmatpush1.msra.mxu0 0.0
  %284 = vmatprep.subr.mxu0 0.0
  %285 = vmatpush1.msra.mxu0 0.0
  %286 = vmatprep.subr.mxu0 0.0
  %287 = vmatpush1.msra.mxu0 0.0
  %288 = vmatprep.subr.mxu0 0.0
  %289 = vmatpush1.msra.mxu0 0.0
  %290 = vmatprep.subr.mxu0 0.0
  %291 = vmatpush1.msra.mxu0 0.0
  %292 = vmatprep.subr.mxu0 0.0
  %293 = vmatpush1.msra.mxu0 0.0
  %294 = vmatprep.subr.mxu0 0.0
  %295 = vmatpush1.msra.mxu0 0.0
  %296 = vmatprep.subr.mxu0 0.0
  %297 = vmatpush1.msra.mxu0 0.0
  %298 = vmatprep.subr.mxu0 0.0
  %299 = vmatpush1.msra.mxu0 0.0
  %300 = vmatprep.subr.mxu0 0.0
  %301 = vmatpush1.msra.mxu0 0.0
  %302 = vmatprep.subr.mxu0 0.0
  %303 = vmatpush1.msra.mxu0 0.0
  %304 = vmatprep.subr.mxu0 0.0
  %305 = vmatpush1.msra.mxu0 0.0
  %306 = vmatprep.subr.mxu0 0.0
  %307 = vmatpush1.msra.mxu0 0.0
  %308 = vmatprep.subr.mxu0 0.0
  %309 = vmatpush1.msra.mxu0 0.0
  %310 = vmatprep.subr.mxu0 0.0
  %311 = vmatpush1.msra.mxu0 0.0
  %312 = vmatprep.subr.mxu0 0.0
  %313 = vmatpush1.msra.mxu0 0.0
  %314 = vmatprep.subr.mxu0 0.0
  %315 = vmatpush1.msra.mxu0 0.0
  %316 = vmatprep.subr.mxu0 0.0
  %317 = vmatpush1.msra.mxu0 0.0
  %318 = vmatprep.subr.mxu0 0.0
  %319 = vmatpush1.msra.mxu0 0.0
  %320 = vmatprep.subr.mxu0 0.0
  %321 = vmatpush1.msra.mxu0 0.0
  %322 = vmatprep.subr.mxu0 0.0
  %323 = vmatpush1.msra.mxu0 0.0
  %324 = vmatprep.subr.mxu0 0.0
  %325 = vmatpush1.msra.mxu0 0.0
  %326 = vmatprep.mubr.f32.mxu0 0.0
  %327 = vmatmul.mubr.f32.gmra.mrb[0].mxu0 %v260
  %v328 = vpop.f32.mrb[0].mxu0
  %v329 = vadd.f32 %v146, %v328
  %v330 = vpop.f32.mrb[0].mxu0
  %331 = vdwg.mxu0
  %v332 = vtanh.pop %v329
  %333 = vst.msk [vmem:[#allocation2] sm:$0xff] %vm183, %v332
  %v335 = vsel %vm183, %v332, 0
  %337 = vmatprep.subr.mxu0 0.0
  %338 = vmatpush1.msra.mxu0 %v17
  %339 = vmatprep.subr.mxu0 0.0
  %340 = vmatpush1.msra.mxu0 %v18
  %341 = vmatprep.subr.mxu0 0.0
  %342 = vmatpush1.msra.mxu0 %v19
  %343 = vmatprep.subr.mxu0 0.0
  %344 = vmatpush1.msra.mxu0 %v20
  %345 = vmatprep.subr.mxu0 0.0
  %346 = vmatpush1.msra.mxu0 %v21
  %347 = vmatprep.subr.mxu0 0.0
  %348 = vmatpush1.msra.mxu0 %v22
  %349 = vmatprep.subr.mxu0 0.0
  %350 = vmatpush1.msra.mxu0 %v23
  %351 = vmatprep.subr.mxu0 0.0
  %352 = vmatpush1.msra.mxu0 %v24
  %353 = vmatprep.subr.mxu0 0.0
  %354 = vmatpush1.msra.mxu0 0.0
  %355 = vmatprep.subr.mxu0 0.0
  %356 = vmatpush1.msra.mxu0 0.0
  %357 = vmatprep.subr.mxu0 0.0
  %358 = vmatpush1.msra.mxu0 0.0
  %359 = vmatprep.subr.mxu0 0.0
  %360 = vmatpush1.msra.mxu0 0.0
  %361 = vmatprep.subr.mxu0 0.0
  %362 = vmatpush1.msra.mxu0 0.0
  %363 = vmatprep.subr.mxu0 0.0
  %364 = vmatpush1.msra.mxu0 0.0
  %365 = vmatprep.subr.mxu0 0.0
  %366 = vmatpush1.msra.mxu0 0.0
  %367 = vmatprep.subr.mxu0 0.0
  %368 = vmatpush1.msra.mxu0 0.0
  %369 = vmatprep.subr.mxu0 0.0
  %370 = vmatpush1.msra.mxu0 0.0
  %371 = vmatprep.subr.mxu0 0.0
  %372 = vmatpush1.msra.mxu0 0.0
  %373 = vmatprep.subr.mxu0 0.0
  %374 = vmatpush1.msra.mxu0 0.0
  %375 = vmatprep.subr.mxu0 0.0
  %376 = vmatpush1.msra.mxu0 0.0
  %377 = vmatprep.subr.mxu0 0.0
  %378 = vmatpush1.msra.mxu0 0.0
  %379 = vmatprep.subr.mxu0 0.0
  %380 = vmatpush1.msra.mxu0 0.0
  %381 = vmatprep.subr.mxu0 0.0
  %382 = vmatpush1.msra.mxu0 0.0
  %383 = vmatprep.subr.mxu0 0.0
  %384 = vmatpush1.msra.mxu0 0.0
  %385 = vmatprep.subr.mxu0 0.0
  %386 = vmatpush1.msra.mxu0 0.0
  %387 = vmatprep.subr.mxu0 0.0
  %388 = vmatpush1.msra.mxu0 0.0
  %389 = vmatprep.subr.mxu0 0.0
  %390 = vmatpush1.msra.mxu0 0.0
  %391 = vmatprep.subr.mxu0 0.0
  %392 = vmatpush1.msra.mxu0 0.0
  %393 = vmatprep.subr.mxu0 0.0
  %394 = vmatpush1.msra.mxu0 0.0
  %395 = vmatprep.subr.mxu0 0.0
  %396 = vmatpush1.msra.mxu0 0.0
  %397 = vmatprep.subr.mxu0 0.0
  %398 = vmatpush1.msra.mxu0 0.0
  %399 = vmatprep.subr.mxu0 0.0
  %400 = vmatpush1.msra.mxu0 0.0
  %401 = vmatprep.mubr.f32.mxu0 0.0
  %402 = vmatmul.mubr.f32.gmra.mrb[0].mxu0 %v335
  %v403 = vpop.f32.mrb[0].mxu0
  %v404 = vadd.f32 %v151, %v403
  %v405 = vpop.f32.mrb[0].mxu0
  %406 = vdwg.mxu0
  %v407 = vtanh.pop %v404
  %408 = vst.msk [vmem:[#allocation2 + $0x8] sm:$0xff] %vm183, %v407
  %v410 = vsel %vm183, %v407, 0
  %412 = vmatprep.subr.mxu0 0.0
  %413 = vmatpush1.msra.mxu0 %v17
  %414 = vmatprep.subr.mxu0 0.0
  %415 = vmatpush1.msra.mxu0 %v18
  %416 = vmatprep.subr.mxu0 0.0
  %417 = vmatpush1.msra.mxu0 %v19
  %418 = vmatprep.subr.mxu0 0.0
  %419 = vmatpush1.msra.mxu0 %v20
  %420 = vmatprep.subr.mxu0 0.0
  %421 = vmatpush1.msra.mxu0 %v21
  %422 = vmatprep.subr.mxu0 0.0
  %423 = vmatpush1.msra.mxu0 %v22
  %424 = vmatprep.subr.mxu0 0.0
  %425 = vmatpush1.msra.mxu0 %v23
  %426 = vmatprep.subr.mxu0 0.0
  %427 = vmatpush1.msra.mxu0 %v24
  %428 = vmatprep.subr.mxu0 0.0
  %429 = vmatpush1.msra.mxu0 0.0
  %430 = vmatprep.subr.mxu0 0.0
  %431 = vmatpush1.msra.mxu0 0.0
  %432 = vmatprep.subr.mxu0 0.0
  %433 = vmatpush1.msra.mxu0 0.0
  %434 = vmatprep.subr.mxu0 0.0
  %435 = vmatpush1.msra.mxu0 0.0
  %436 = vmatprep.subr.mxu0 0.0
  %437 = vmatpush1.msra.mxu0 0.0
  %438 = vmatprep.subr.mxu0 0.0
  %439 = vmatpush1.msra.mxu0 0.0
  %440 = vmatprep.subr.mxu0 0.0
  %441 = vmatpush1.msra.mxu0 0.0
  %442 = vmatprep.subr.mxu0 0.0
  %443 = vmatpush1.msra.mxu0 0.0
  %444 = vmatprep.subr.mxu0 0.0
  %445 = vmatpush1.msra.mxu0 0.0
  %446 = vmatprep.subr.mxu0 0.0
  %447 = vmatpush1.msra.mxu0 0.0
  %448 = vmatprep.subr.mxu0 0.0
  %449 = vmatpush1.msra.mxu0 0.0
  %450 = vmatprep.subr.mxu0 0.0
  %451 = vmatpush1.msra.mxu0 0.0
  %452 = vmatprep.subr.mxu0 0.0
  %453 = vmatpush1.msra.mxu0 0.0
  %454 = vmatprep.subr.mxu0 0.0
  %455 = vmatpush1.msra.mxu0 0.0
  %456 = vmatprep.subr.mxu0 0.0
  %457 = vmatpush1.msra.mxu0 0.0
  %458 = vmatprep.subr.mxu0 0.0
  %459 = vmatpush1.msra.mxu0 0.0
  %460 = vmatprep.subr.mxu0 0.0
  %461 = vmatpush1.msra.mxu0 0.0
  %462 = vmatprep.subr.mxu0 0.0
  %463 = vmatpush1.msra.mxu0 0.0
  %464 = vmatprep.subr.mxu0 0.0
  %465 = vmatpush1.msra.mxu0 0.0
  %466 = vmatprep.subr.mxu0 0.0
  %467 = vmatpush1.msra.mxu0 0.0
  %468 = vmatprep.subr.mxu0 0.0
  %469 = vmatpush1.msra.mxu0 0.0
  %470 = vmatprep.subr.mxu0 0.0
  %471 = vmatpush1.msra.mxu0 0.0
  %472 = vmatprep.subr.mxu0 0.0
  %473 = vmatpush1.msra.mxu0 0.0
  %474 = vmatprep.subr.mxu0 0.0
  %475 = vmatpush1.msra.mxu0 0.0
  %476 = vmatprep.mubr.f32.mxu0 0.0
  %477 = vmatmul.mubr.f32.gmra.mrb[0].mxu0 %v410
  %v478 = vpop.f32.mrb[0].mxu0
  %v479 = vadd.f32 %v156, %v478
  %v480 = vpop.f32.mrb[0].mxu0
  %481 = vdwg.mxu0
  %v482 = vtanh.pop %v479
  %483 = vst.msk [vmem:[#allocation2 + $0x10] sm:$0xff] %vm183, %v482
  %v485 = vsel %vm183, %v482, 0
  %487 = vmatprep.subr.mxu0 0.0
  %488 = vmatpush1.msra.mxu0 %v17
  %489 = vmatprep.subr.mxu0 0.0
  %490 = vmatpush1.msra.mxu0 %v18
  %491 = vmatprep.subr.mxu0 0.0
  %492 = vmatpush1.msra.mxu0 %v19
  %493 = vmatprep.subr.mxu0 0.0
  %494 = vmatpush1.msra.mxu0 %v20
  %495 = vmatprep.subr.mxu0 0.0
  %496 = vmatpush1.msra.mxu0 %v21
  %497 = vmatprep.subr.mxu0 0.0
  %498 = vmatpush1.msra.mxu0 %v22
  %499 = vmatprep.subr.mxu0 0.0
  %500 = vmatpush1.msra.mxu0 %v23
  %501 = vmatprep.subr.mxu0 0.0
  %502 = vmatpush1.msra.mxu0 %v24
  %503 = vmatprep.subr.mxu0 0.0
  %504 = vmatpush1.msra.mxu0 0.0
  %505 = vmatprep.subr.mxu0 0.0
  %506 = vmatpush1.msra.mxu0 0.0
  %507 = vmatprep.subr.mxu0 0.0
  %508 = vmatpush1.msra.mxu0 0.0
  %509 = vmatprep.subr.mxu0 0.0
  %510 = vmatpush1.msra.mxu0 0.0
  %511 = vmatprep.subr.mxu0 0.0
  %512 = vmatpush1.msra.mxu0 0.0
  %513 = vmatprep.subr.mxu0 0.0
  %514 = vmatpush1.msra.mxu0 0.0
  %515 = vmatprep.subr.mxu0 0.0
  %516 = vmatpush1.msra.mxu0 0.0
  %517 = vmatprep.subr.mxu0 0.0
  %518 = vmatpush1.msra.mxu0 0.0
  %519 = vmatprep.subr.mxu0 0.0
  %520 = vmatpush1.msra.mxu0 0.0
  %521 = vmatprep.subr.mxu0 0.0
  %522 = vmatpush1.msra.mxu0 0.0
  %523 = vmatprep.subr.mxu0 0.0
  %524 = vmatpush1.msra.mxu0 0.0
  %525 = vmatprep.subr.mxu0 0.0
  %526 = vmatpush1.msra.mxu0 0.0
  %527 = vmatprep.subr.mxu0 0.0
  %528 = vmatpush1.msra.mxu0 0.0
  %529 = vmatprep.subr.mxu0 0.0
  %530 = vmatpush1.msra.mxu0 0.0
  %531 = vmatprep.subr.mxu0 0.0
  %532 = vmatpush1.msra.mxu0 0.0
  %533 = vmatprep.subr.mxu0 0.0
  %534 = vmatpush1.msra.mxu0 0.0
  %535 = vmatprep.subr.mxu0 0.0
  %536 = vmatpush1.msra.mxu0 0.0
  %537 = vmatprep.subr.mxu0 0.0
  %538 = vmatpush1.msra.mxu0 0.0
  %539 = vmatprep.subr.mxu0 0.0
  %540 = vmatpush1.msra.mxu0 0.0
  %541 = vmatprep.subr.mxu0 0.0
  %542 = vmatpush1.msra.mxu0 0.0
  %543 = vmatprep.subr.mxu0 0.0
  %544 = vmatpush1.msra.mxu0 0.0
  %545 = vmatprep.subr.mxu0 0.0
  %546 = vmatpush1.msra.mxu0 0.0
  %547 = vmatprep.subr.mxu0 0.0
  %548 = vmatpush1.msra.mxu0 0.0
  %549 = vmatprep.subr.mxu0 0.0
  %550 = vmatpush1.msra.mxu0 0.0
  %551 = vmatprep.mubr.f32.mxu0 0.0
  %552 = vmatmul.mubr.f32.gmra.mrb[0].mxu0 %v485
  %v553 = vpop.f32.mrb[0].mxu0
  %v554 = vadd.f32 %v161, %v553
  %v555 = vpop.f32.mrb[0].mxu0
  %556 = vdwg.mxu0
  %v557 = vtanh.pop %v554
  %558 = vst.msk [vmem:[#allocation2 + $0x18] sm:$0xff] %vm183, %v557
  %v560 = vsel %vm183, %v557, 0
  %562 = vmatprep.subr.mxu0 0.0
  %563 = vmatpush1.msra.mxu0 %v17
  %564 = vmatprep.subr.mxu0 0.0
  %565 = vmatpush1.msra.mxu0 %v18
  %566 = vmatprep.subr.mxu0 0.0
  %567 = vmatpush1.msra.mxu0 %v19
  %568 = vmatprep.subr.mxu0 0.0
  %569 = vmatpush1.msra.mxu0 %v20
  %570 = vmatprep.subr.mxu0 0.0
  %571 = vmatpush1.msra.mxu0 %v21
  %572 = vmatprep.subr.mxu0 0.0
  %573 = vmatpush1.msra.mxu0 %v22
  %574 = vmatprep.subr.mxu0 0.0
  %575 = vmatpush1.msra.mxu0 %v23
  %576 = vmatprep.subr.mxu0 0.0
  %577 = vmatpush1.msra.mxu0 %v24
  %578 = vmatprep.subr.mxu0 0.0
  %579 = vmatpush1.msra.mxu0 0.0
  %580 = vmatprep.subr.mxu0 0.0
  %581 = vmatpush1.msra.mxu0 0.0
  %582 = vmatprep.subr.mxu0 0.0
  %583 = vmatpush1.msra.mxu0 0.0
  %584 = vmatprep.subr.mxu0 0.0
  %585 = vmatpush1.msra.mxu0 0.0
  %586 = vmatprep.subr.mxu0 0.0
  %587 = vmatpush1.msra.mxu0 0.0
  %588 = vmatprep.subr.mxu0 0.0
  %589 = vmatpush1.msra.mxu0 0.0
  %590 = vmatprep.subr.mxu0 0.0
  %591 = vmatpush1.msra.mxu0 0.0
  %592 = vmatprep.subr.mxu0 0.0
  %593 = vmatpush1.msra.mxu0 0.0
  %594 = vmatprep.subr.mxu0 0.0
  %595 = vmatpush1.msra.mxu0 0.0
  %596 = vmatprep.subr.mxu0 0.0
  %597 = vmatpush1.msra.mxu0 0.0
  %598 = vmatprep.subr.mxu0 0.0
  %599 = vmatpush1.msra.mxu0 0.0
  %600 = vmatprep.subr.mxu0 0.0
  %601 = vmatpush1.msra.mxu0 0.0
  %602 = vmatprep.subr.mxu0 0.0
  %603 = vmatpush1.msra.mxu0 0.0
  %604 = vmatprep.subr.mxu0 0.0
  %605 = vmatpush1.msra.mxu0 0.0
  %606 = vmatprep.subr.mxu0 0.0
  %607 = vmatpush1.msra.mxu0 0.0
  %608 = vmatprep.subr.mxu0 0.0
  %609 = vmatpush1.msra.mxu0 0.0
  %610 = vmatprep.subr.mxu0 0.0
  %611 = vmatpush1.msra.mxu0 0.0
  %612 = vmatprep.subr.mxu0 0.0
  %613 = vmatpush1.msra.mxu0 0.0
  %614 = vmatprep.subr.mxu0 0.0
  %615 = vmatpush1.msra.mxu0 0.0
  %616 = vmatprep.subr.mxu0 0.0
  %617 = vmatpush1.msra.mxu0 0.0
  %618 = vmatprep.subr.mxu0 0.0
  %619 = vmatpush1.msra.mxu0 0.0
  %620 = vmatprep.subr.mxu0 0.0
  %621 = vmatpush1.msra.mxu0 0.0
  %622 = vmatprep.subr.mxu0 0.0
  %623 = vmatpush1.msra.mxu0 0.0
  %624 = vmatprep.subr.mxu0 0.0
  %625 = vmatpush1.msra.mxu0 0.0
  %626 = vmatprep.mubr.f32.mxu0 0.0
  %627 = vmatmul.mubr.f32.gmra.mrb[0].mxu0 %v560
  %v628 = vpop.f32.mrb[0].mxu0
  %v629 = vadd.f32 %v166, %v628
  %v630 = vpop.f32.mrb[0].mxu0
  %631 = vdwg.mxu0
  %v632 = vtanh.pop %v629
  %633 = vst.msk [vmem:[#allocation2 + $0x20] sm:$0xff] %vm183, %v632
  %v635 = vsel %vm183, %v632, 0
  %637 = vmatprep.subr.mxu0 0.0
  %638 = vmatpush1.msra.mxu0 %v17
  %639 = vmatprep.subr.mxu0 0.0
  %640 = vmatpush1.msra.mxu0 %v18
  %641 = vmatprep.subr.mxu0 0.0
  %642 = vmatpush1.msra.mxu0 %v19
  %643 = vmatprep.subr.mxu0 0.0
  %644 = vmatpush1.msra.mxu0 %v20
  %645 = vmatprep.subr.mxu0 0.0
  %646 = vmatpush1.msra.mxu0 %v21
  %647 = vmatprep.subr.mxu0 0.0
  %648 = vmatpush1.msra.mxu0 %v22
  %649 = vmatprep.subr.mxu0 0.0
  %650 = vmatpush1.msra.mxu0 %v23
  %651 = vmatprep.subr.mxu0 0.0
  %652 = vmatpush1.msra.mxu0 %v24
  %653 = vmatprep.subr.mxu0 0.0
  %654 = vmatpush1.msra.mxu0 0.0
  %655 = vmatprep.subr.mxu0 0.0
  %656 = vmatpush1.msra.mxu0 0.0
  %657 = vmatprep.subr.mxu0 0.0
  %658 = vmatpush1.msra.mxu0 0.0
  %659 = vmatprep.subr.mxu0 0.0
  %660 = vmatpush1.msra.mxu0 0.0
  %661 = vmatprep.subr.mxu0 0.0
  %662 = vmatpush1.msra.mxu0 0.0
  %663 = vmatprep.subr.mxu0 0.0
  %664 = vmatpush1.msra.mxu0 0.0
  %665 = vmatprep.subr.mxu0 0.0
  %666 = vmatpush1.msra.mxu0 0.0
  %667 = vmatprep.subr.mxu0 0.0
  %668 = vmatpush1.msra.mxu0 0.0
  %669 = vmatprep.subr.mxu0 0.0
  %670 = vmatpush1.msra.mxu0 0.0
  %671 = vmatprep.subr.mxu0 0.0
  %672 = vmatpush1.msra.mxu0 0.0
  %673 = vmatprep.subr.mxu0 0.0
  %674 = vmatpush1.msra.mxu0 0.0
  %675 = vmatprep.subr.mxu0 0.0
  %676 = vmatpush1.msra.mxu0 0.0
  %677 = vmatprep.subr.mxu0 0.0
  %678 = vmatpush1.msra.mxu0 0.0
  %679 = vmatprep.subr.mxu0 0.0
  %680 = vmatpush1.msra.mxu0 0.0
  %681 = vmatprep.subr.mxu0 0.0
  %682 = vmatpush1.msra.mxu0 0.0
  %683 = vmatprep.subr.mxu0 0.0
  %684 = vmatpush1.msra.mxu0 0.0
  %685 = vmatprep.subr.mxu0 0.0
  %686 = vmatpush1.msra.mxu0 0.0
  %687 = vmatprep.subr.mxu0 0.0
  %688 = vmatpush1.msra.mxu0 0.0
  %689 = vmatprep.subr.mxu0 0.0
  %690 = vmatpush1.msra.mxu0 0.0
  %691 = vmatprep.subr.mxu0 0.0
  %692 = vmatpush1.msra.mxu0 0.0
  %693 = vmatprep.subr.mxu0 0.0
  %694 = vmatpush1.msra.mxu0 0.0
  %695 = vmatprep.subr.mxu0 0.0
  %696 = vmatpush1.msra.mxu0 0.0
  %697 = vmatprep.subr.mxu0 0.0
  %698 = vmatpush1.msra.mxu0 0.0
  %699 = vmatprep.subr.mxu0 0.0
  %700 = vmatpush1.msra.mxu0 0.0
  %701 = vmatprep.mubr.f32.mxu0 0.0
  %702 = vmatmul.mubr.f32.gmra.mrb[0].mxu0 %v635
  %v703 = vpop.f32.mrb[0].mxu0
  %v704 = vadd.f32 %v171, %v703
  %v705 = vpop.f32.mrb[0].mxu0
  %706 = vdwg.mxu0
  %v707 = vtanh.pop %v704
  %708 = vst.msk [vmem:[#allocation2 + $0x28] sm:$0xff] %vm183, %v707
  %v710 = vsel %vm183, %v707, 0
  %712 = vmatprep.subr.mxu0 0.0
  %713 = vmatpush1.msra.mxu0 %v17
  %714 = vmatprep.subr.mxu0 0.0
  %715 = vmatpush1.msra.mxu0 %v18
  %716 = vmatprep.subr.mxu0 0.0
  %717 = vmatpush1.msra.mxu0 %v19
  %718 = vmatprep.subr.mxu0 0.0
  %719 = vmatpush1.msra.mxu0 %v20
  %720 = vmatprep.subr.mxu0 0.0
  %721 = vmatpush1.msra.mxu0 %v21
  %722 = vmatprep.subr.mxu0 0.0
  %723 = vmatpush1.msra.mxu0 %v22
  %724 = vmatprep.subr.mxu0 0.0
  %725 = vmatpush1.msra.mxu0 %v23
  %726 = vmatprep.subr.mxu0 0.0
  %727 = vmatpush1.msra.mxu0 %v24
  %728 = vmatprep.subr.mxu0 0.0
  %729 = vmatpush1.msra.mxu0 0.0
  %730 = vmatprep.subr.mxu0 0.0
  %731 = vmatpush1.msra.mxu0 0.0
  %732 = vmatprep.subr.mxu0 0.0
  %733 = vmatpush1.msra.mxu0 0.0
  %734 = vmatprep.subr.mxu0 0.0
  %735 = vmatpush1.msra.mxu0 0.0
  %736 = vmatprep.subr.mxu0 0.0
  %737 = vmatpush1.msra.mxu0 0.0
  %738 = vmatprep.subr.mxu0 0.0
  %739 = vmatpush1.msra.mxu0 0.0
  %740 = vmatprep.subr.mxu0 0.0
  %741 = vmatpush1.msra.mxu0 0.0
  %742 = vmatprep.subr.mxu0 0.0
  %743 = vmatpush1.msra.mxu0 0.0
  %744 = vmatprep.subr.mxu0 0.0
  %745 = vmatpush1.msra.mxu0 0.0
  %746 = vmatprep.subr.mxu0 0.0
  %747 = vmatpush1.msra.mxu0 0.0
  %748 = vmatprep.subr.mxu0 0.0
  %749 = vmatpush1.msra.mxu0 0.0
  %750 = vmatprep.subr.mxu0 0.0
  %751 = vmatpush1.msra.mxu0 0.0
  %752 = vmatprep.subr.mxu0 0.0
  %753 = vmatpush1.msra.mxu0 0.0
  %754 = vmatprep.subr.mxu0 0.0
  %755 = vmatpush1.msra.mxu0 0.0
  %756 = vmatprep.subr.mxu0 0.0
  %757 = vmatpush1.msra.mxu0 0.0
  %758 = vmatprep.subr.mxu0 0.0
  %759 = vmatpush1.msra.mxu0 0.0
  %760 = vmatprep.subr.mxu0 0.0
  %761 = vmatpush1.msra.mxu0 0.0
  %762 = vmatprep.subr.mxu0 0.0
  %763 = vmatpush1.msra.mxu0 0.0
  %764 = vmatprep.subr.mxu0 0.0
  %765 = vmatpush1.msra.mxu0 0.0
  %766 = vmatprep.subr.mxu0 0.0
  %767 = vmatpush1.msra.mxu0 0.0
  %768 = vmatprep.subr.mxu0 0.0
  %769 = vmatpush1.msra.mxu0 0.0
  %770 = vmatprep.subr.mxu0 0.0
  %771 = vmatpush1.msra.mxu0 0.0
  %772 = vmatprep.subr.mxu0 0.0
  %773 = vmatpush1.msra.mxu0 0.0
  %774 = vmatprep.subr.mxu0 0.0
  %775 = vmatpush1.msra.mxu0 0.0
  %776 = vmatprep.mubr.f32.mxu0 0.0
  %777 = vmatmul.mubr.f32.gmra.mrb[0].mxu0 %v710
  %v778 = vpop.f32.mrb[0].mxu0
  %v779 = vadd.f32 %v176, %v778
  %v780 = vpop.f32.mrb[0].mxu0
  %781 = vdwg.mxu0
  %v782 = vtanh.pop %v779
  %783 = vst.msk [vmem:[#allocation2 + $0x30] sm:$0xff] %vm183, %v782
  %v785 = vsel %vm183, %v782, 0
  %787 = vmatprep.subr.mxu0 0.0
  %788 = vmatpush1.msra.mxu0 %v17
  %789 = vmatprep.subr.mxu0 0.0
  %790 = vmatpush1.msra.mxu0 %v18
  %791 = vmatprep.subr.mxu0 0.0
  %792 = vmatpush1.msra.mxu0 %v19
  %793 = vmatprep.subr.mxu0 0.0
  %794 = vmatpush1.msra.mxu0 %v20
  %795 = vmatprep.subr.mxu0 0.0
  %796 = vmatpush1.msra.mxu0 %v21
  %797 = vmatprep.subr.mxu0 0.0
  %798 = vmatpush1.msra.mxu0 %v22
  %799 = vmatprep.subr.mxu0 0.0
  %800 = vmatpush1.msra.mxu0 %v23
  %801 = vmatprep.subr.mxu0 0.0
  %802 = vmatpush1.msra.mxu0 %v24
  %803 = vmatprep.subr.mxu0 0.0
  %804 = vmatpush1.msra.mxu0 0.0
  %805 = vmatprep.subr.mxu0 0.0
  %806 = vmatpush1.msra.mxu0 0.0
  %807 = vmatprep.subr.mxu0 0.0
  %808 = vmatpush1.msra.mxu0 0.0
  %809 = vmatprep.subr.mxu0 0.0
  %810 = vmatpush1.msra.mxu0 0.0
  %811 = vmatprep.subr.mxu0 0.0
  %812 = vmatpush1.msra.mxu0 0.0
  %813 = vmatprep.subr.mxu0 0.0
  %814 = vmatpush1.msra.mxu0 0.0
  %815 = vmatprep.subr.mxu0 0.0
  %816 = vmatpush1.msra.mxu0 0.0
  %817 = vmatprep.subr.mxu0 0.0
  %818 = vmatpush1.msra.mxu0 0.0
  %819 = vmatprep.subr.mxu0 0.0
  %820 = vmatpush1.msra.mxu0 0.0
  %821 = vmatprep.subr.mxu0 0.0
  %822 = vmatpush1.msra.mxu0 0.0
  %823 = vmatprep.subr.mxu0 0.0
  %824 = vmatpush1.msra.mxu0 0.0
  %825 = vmatprep.subr.mxu0 0.0
  %826 = vmatpush1.msra.mxu0 0.0
  %827 = vmatprep.subr.mxu0 0.0
  %828 = vmatpush1.msra.mxu0 0.0
  %829 = vmatprep.subr.mxu0 0.0
  %830 = vmatpush1.msra.mxu0 0.0
  %831 = vmatprep.subr.mxu0 0.0
  %832 = vmatpush1.msra.mxu0 0.0
  %833 = vmatprep.subr.mxu0 0.0
  %834 = vmatpush1.msra.mxu0 0.0
  %835 = vmatprep.subr.mxu0 0.0
  %836 = vmatpush1.msra.mxu0 0.0
  %837 = vmatprep.subr.mxu0 0.0
  %838 = vmatpush1.msra.mxu0 0.0
  %839 = vmatprep.subr.mxu0 0.0
  %840 = vmatpush1.msra.mxu0 0.0
  %841 = vmatprep.subr.mxu0 0.0
  %842 = vmatpush1.msra.mxu0 0.0
  %843 = vmatprep.subr.mxu0 0.0
  %844 = vmatpush1.msra.mxu0 0.0
  %845 = vmatprep.subr.mxu0 0.0
  %846 = vmatpush1.msra.mxu0 0.0
  %847 = vmatprep.subr.mxu0 0.0
  %848 = vmatpush1.msra.mxu0 0.0
  %849 = vmatprep.subr.mxu0 0.0
  %850 = vmatpush1.msra.mxu0 0.0
  %851 = vmatprep.mubr.f32.mxu0 0.0
  %852 = vmatmul.mubr.f32.gmra.mrb[0].mxu0 %v785
  %v853 = vpop.f32.mrb[0].mxu0
  %v854 = vadd.f32 %v141, %v853
  %v855 = vpop.f32.mrb[0].mxu0
  %856 = vdwg.mxu0
  %v857 = vtanh.pop %v854
  %858 = vst.msk [vmem:[#allocation2 + $0x38] sm:$0xff] %vm183, %v857
  %v859 = vld [vmem:[#allocation2] sm:$0xff]
  %v860 = vld [vmem:[#allocation2 + $0x8] sm:$0xff]
  %v861 = vld [vmem:[#allocation2 + $0x10] sm:$0xff]
  %v862 = vld [vmem:[#allocation2 + $0x18] sm:$0xff]
  %v863 = vld [vmem:[#allocation2 + $0x20] sm:$0xff]
  %v864 = vld [vmem:[#allocation2 + $0x28] sm:$0xff]
  %v865 = vld [vmem:[#allocation2 + $0x30] sm:$0xff]
  %v866 = vld [vmem:[#allocation2 + $0x38] sm:$0xff]
  %v867 = vlaneseq
  %v868 = vshrl.u32 %v867, 7
  %v869 = vsub.s32 0, %v868
  %v870 = vrot.slane %v16, %v869
  %v872 = vsel %vm183, %v859, 0
  %v875 = vsel %vm183, %v860, 0
  %v878 = vsel %vm183, %v861, 0
  %v881 = vsel %vm183, %v862, 0
  %v884 = vsel %vm183, %v863, 0
  %v887 = vsel %vm183, %v864, 0
  %v890 = vsel %vm183, %v865, 0
  %v893 = vsel %vm183, %v866, 0
  %895 = vmatprep.subr.mxu0 0.0
  %896 = vmatpush1.msra.mxu0 %v25
  %897 = vmatprep.subr.mxu0 0.0
  %898 = vmatpush1.msra.mxu0 %v26
  %899 = vmatprep.subr.mxu0 0.0
  %900 = vmatpush1.msra.mxu0 %v27
  %901 = vmatprep.subr.mxu0 0.0
  %902 = vmatpush1.msra.mxu0 %v28
  %903 = vmatprep.subr.mxu0 0.0
  %904 = vmatpush1.msra.mxu0 %v29
  %905 = vmatprep.subr.mxu0 0.0
  %906 = vmatpush1.msra.mxu0 %v30
  %907 = vmatprep.subr.mxu0 0.0
  %908 = vmatpush1.msra.mxu0 %v31
  %909 = vmatprep.subr.mxu0 0.0
  %910 = vmatpush1.msra.mxu0 %v32
  %911 = vmatprep.subr.mxu0 0.0
  %912 = vmatpush1.msra.mxu0 0.0
  %913 = vmatprep.subr.mxu0 0.0
  %914 = vmatpush1.msra.mxu0 0.0
  %915 = vmatprep.subr.mxu0 0.0
  %916 = vmatpush1.msra.mxu0 0.0
  %917 = vmatprep.subr.mxu0 0.0
  %918 = vmatpush1.msra.mxu0 0.0
  %919 = vmatprep.subr.mxu0 0.0
  %920 = vmatpush1.msra.mxu0 0.0
  %921 = vmatprep.subr.mxu0 0.0
  %922 = vmatpush1.msra.mxu0 0.0
  %923 = vmatprep.subr.mxu0 0.0
  %924 = vmatpush1.msra.mxu0 0.0
  %925 = vmatprep.subr.mxu0 0.0
  %926 = vmatpush1.msra.mxu0 0.0
  %927 = vmatprep.subr.mxu0 0.0
  %928 = vmatpush1.msra.mxu0 0.0
  %929 = vmatprep.subr.mxu0 0.0
  %930 = vmatpush1.msra.mxu0 0.0
  %931 = vmatprep.subr.mxu0 0.0
  %932 = vmatpush1.msra.mxu0 0.0
  %933 = vmatprep.subr.mxu0 0.0
  %934 = vmatpush1.msra.mxu0 0.0
  %935 = vmatprep.subr.mxu0 0.0
  %936 = vmatpush1.msra.mxu0 0.0
  %937 = vmatprep.subr.mxu0 0.0
  %938 = vmatpush1.msra.mxu0 0.0
  %939 = vmatprep.subr.mxu0 0.0
  %940 = vmatpush1.msra.mxu0 0.0
  %941 = vmatprep.subr.mxu0 0.0
  %942 = vmatpush1.msra.mxu0 0.0
  %943 = vmatprep.subr.mxu0 0.0
  %944 = vmatpush1.msra.mxu0 0.0
  %945 = vmatprep.subr.mxu0 0.0
  %946 = vmatpush1.msra.mxu0 0.0
  %947 = vmatprep.subr.mxu0 0.0
  %948 = vmatpush1.msra.mxu0 0.0
  %949 = vmatprep.subr.mxu0 0.0
  %950 = vmatpush1.msra.mxu0 0.0
  %951 = vmatprep.subr.mxu0 0.0
  %952 = vmatpush1.msra.mxu0 0.0
  %953 = vmatprep.subr.mxu0 0.0
  %954 = vmatpush1.msra.mxu0 0.0
  %955 = vmatprep.subr.mxu0 0.0
  %956 = vmatpush1.msra.mxu0 0.0
  %957 = vmatprep.subr.mxu0 0.0
  %958 = vmatpush1.msra.mxu0 0.0
  %959 = vmatprep.mubr.f32.mxu0 0.0
  %960 = vmatmul.mubr.f32.gmra.mrb[0].mxu0 %v872
  %v961 = vpop.f32.mrb[0].mxu0
  %v962 = vadd.f32 %v870, %v961
  %v963 = vpop.f32.mrb[0].mxu0
  %964 = vmatprep.mubr.f32.mxu0 0.0
  %965 = vmatmul.mubr.f32.gmra.mrb[0].mxu0 %v875
  %v966 = vpop.f32.mrb[0].mxu0
  %v967 = vadd.f32 %v870, %v966
  %v968 = vpop.f32.mrb[0].mxu0
  %969 = vmatprep.mubr.f32.mxu0 0.0
  %970 = vmatmul.mubr.f32.gmra.mrb[0].mxu0 %v878
  %v971 = vpop.f32.mrb[0].mxu0
  %v972 = vadd.f32 %v870, %v971
  %v973 = vpop.f32.mrb[0].mxu0
  %974 = vmatprep.mubr.f32.mxu0 0.0
  %975 = vmatmul.mubr.f32.gmra.mrb[0].mxu0 %v881
  %v976 = vpop.f32.mrb[0].mxu0
  %v977 = vadd.f32 %v870, %v976
  %v978 = vpop.f32.mrb[0].mxu0
  %979 = vmatprep.mubr.f32.mxu0 0.0
  %980 = vmatmul.mubr.f32.gmra.mrb[0].mxu0 %v884
  %v981 = vpop.f32.mrb[0].mxu0
  %v982 = vadd.f32 %v870, %v981
  %v983 = vpop.f32.mrb[0].mxu0
  %984 = vmatprep.mubr.f32.mxu0 0.0
  %985 = vmatmul.mubr.f32.gmra.mrb[0].mxu0 %v887
  %v986 = vpop.f32.mrb[0].mxu0
  %v987 = vadd.f32 %v870, %v986
  %v988 = vpop.f32.mrb[0].mxu0
  %989 = vmatprep.mubr.f32.mxu0 0.0
  %990 = vmatmul.mubr.f32.gmra.mrb[0].mxu0 %v890
  %v991 = vpop.f32.mrb[0].mxu0
  %v992 = vadd.f32 %v870, %v991
  %v993 = vpop.f32.mrb[0].mxu0
  %994 = vmatprep.mubr.f32.mxu0 0.0
  %995 = vmatmul.mubr.f32.gmra.mrb[0].mxu0 %v893
  %v996 = vpop.f32.mrb[0].mxu0
  %v997 = vadd.f32 %v870, %v996
  %v998 = vpop.f32.mrb[0].mxu0
  %999 = vdwg.mxu0
  %1000 = vst [vmem:[%s3] sm:$0xff] %v962
  %1001 = vst [vmem:[%s3 + $0x8] sm:$0xff] %v967
  %1002 = vst [vmem:[%s3 + $0x10] sm:$0xff] %v972
  %1003 = vst [vmem:[%s3 + $0x18] sm:$0xff] %v977
  %1004 = vst [vmem:[%s3 + $0x20] sm:$0xff] %v982
  %1005 = vst [vmem:[%s3 + $0x28] sm:$0xff] %v987
  %1006 = vst [vmem:[%s3 + $0x30] sm:$0xff] %v992
  %1007 = vst [vmem:[%s3 + $0x38] sm:$0xff] %v997
  %v1008 = vsel %vm181, %v782, %v857
  %1009 = vst.msk [vmem:[%s3 + $0x40] sm:$0xff] %vm183, %v1008
  // Predicated region
  $region14: #{rnn_forward.1} parent=0 // pred_check
    _
  $region15: #{rnn_forward.1} parent=0 // pred_check_branch
    %1011 = sbr.rel (0) target = $region17
  $region16: #{rnn_forward.1} parent=0 // pred_region
    _
  $region17: #{rnn_forward.1} parent=0 // pred_fallthru
    _
  // Predicated region
  $region18: #{rnn_forward.1} parent=0 // pred_check
    _
  $region19: #{rnn_forward.1} parent=0 // pred_check_branch
    %1013 = sbr.rel (0) target = $region21
  $region20: #{rnn_forward.1} parent=0 // pred_region
    _
  $region21: #{rnn_forward.1} parent=0 // pred_fallthru
    _

</llo_original>
